<compile_context>
chip_gen: v7x
topology: tpu7x:2x2x1
jax: 0.10.0
libtpu: 0.0.40
codegen_flags: <defaults>
</compile_context>

<pallas_src>
import functools

import jax
import jax.numpy as jnp
from jax import lax
from jax.experimental import pallas as pl
from jax.experimental.pallas import tpu as pltpu


# ---------------------------------------------------------------------------
# Kernels
# ---------------------------------------------------------------------------
def _field(s, p0, p1, p2):
    """Lorenz96 vector field on a (TB, D) tile; rolls are lane rotations (XLU)."""
    D = s.shape[-1]
    s_p1 = pltpu.roll(s, shift=D - 1, axis=1)   # state[..., (i+1) % D]
    s_m2 = pltpu.roll(s, shift=2, axis=1)       # state[..., i-2]
    s_m1 = pltpu.roll(s, shift=1, axis=1)       # state[..., i-1]
    return p0 * (s_p1 - s_m2) * s_m1 - p1 * s + p2


def _lorenz96_kernel(params_ref, state_ref, out_ref):
    # params rows kept 2-D (1, D) so they broadcast over the sublane (batch) axis.
    p0 = params_ref[0:1, :]
    p1 = params_ref[1:2, :]
    p2 = params_ref[2:3, :]
    out_ref[...] = _field(state_ref[...], p0, p1, p2)


def _lorenz96_euler_kernel(params_ref, state_ref, out_ref, *, n_steps, dt):
    """N fused forward-Euler steps; state never round-trips HBM between steps."""
    p0 = params_ref[0:1, :]
    p1 = params_ref[1:2, :]
    p2 = params_ref[2:3, :]
    s0 = state_ref[...]

    def body(_, s):
        return s + dt * _field(s, p0, p1, p2)

    out_ref[...] = lax.fori_loop(0, n_steps, body, s0,
                                 unroll=min(8, max(1, n_steps)))


# ---------------------------------------------------------------------------
# Wrappers
# ---------------------------------------------------------------------------
def _round_up(x, m):
    return ((x + m - 1) // m) * m


def _batch_tile(B, block_rows):
    """Batch tile: multiple of 8 sublanes, <= padded batch, <= block_rows, and
    capped at ceil(B/2) (rounded to 8) so the grid has >=2 blocks when B > 8
    (keeps both v7x TensorCores busy)."""
    TB = min(_round_up(B, 8), _round_up(block_rows, 8))
    if B > 8:
        TB = min(TB, _round_up(pl.cdiv(B, 2), 8))
    return max(TB, 8)


_COMPILER_PARAMS = pltpu.CompilerParams(
    dimension_semantics=("parallel",),      # shard batch tiles across TCs (v7x)
    vmem_limit_bytes=40 * 1024 * 1024,      # 4 MiB blocks x2 (in/out) x2 (dbl-buf)
)


def lorenz96_forward(params, state, *, block_rows=8192):
    """Single vector-field evaluation.  params: (3, D) f32, state: (B, D) f32."""
    B, D = state.shape
    assert D % 128 == 0, "D must be a multiple of 128 (lane-dense layout); see TODO"

    TB = _batch_tile(B, block_rows)
    grid = (pl.cdiv(B, TB),)

    cost = pl.CostEstimate(
        flops=6 * B * D,
        bytes_accessed=(2 * B * D + 3 * D) * state.dtype.itemsize,
        transcendentals=0,
    )

    return pl.pallas_call(
        _lorenz96_kernel,
        out_shape=jax.ShapeDtypeStruct((B, D), state.dtype),
        grid=grid,
        in_specs=[
            pl.BlockSpec((3, D), lambda i: (0, 0)),    # params: broadcast to all blocks
            pl.BlockSpec((TB, D), lambda i: (i, 0)),   # state: batch-tiled stream
        ],
        out_specs=pl.BlockSpec((TB, D), lambda i: (i, 0)),
        compiler_params=_COMPILER_PARAMS,
        cost_estimate=cost,
    )(params, state)


def lorenz96_integrate(params, state, *, n_steps, dt, block_rows=8192):
    """Fused n_steps of forward Euler: state stays resident on-chip across all
    field evaluations; HBM traffic is one read + one write total."""
    B, D = state.shape
    assert D % 128 == 0, "D must be a multiple of 128 (lane-dense layout); see TODO"

    TB = _batch_tile(B, block_rows)
    grid = (pl.cdiv(B, TB),)

    cost = pl.CostEstimate(
        flops=8 * B * D * n_steps,
        bytes_accessed=(2 * B * D + 3 * D) * state.dtype.itemsize,
        transcendentals=0,
    )

    kernel = functools.partial(_lorenz96_euler_kernel, n_steps=n_steps, dt=float(dt))

    return pl.pallas_call(
        kernel,
        out_shape=jax.ShapeDtypeStruct((B, D), state.dtype),
        grid=grid,
        in_specs=[
            pl.BlockSpec((3, D), lambda i: (0, 0)),
            pl.BlockSpec((TB, D), lambda i: (i, 0)),
        ],
        out_specs=pl.BlockSpec((TB, D), lambda i: (i, 0)),
        compiler_params=_COMPILER_PARAMS,
        cost_estimate=cost,
    )(params, state)


# ---------------------------------------------------------------------------
# Pure-JAX references
# ---------------------------------------------------------------------------
def lorenz96_reference(params, state):
    s_p1 = jnp.roll(state, -1, axis=-1)
    s_m2 = jnp.roll(state, 2, axis=-1)
    s_m1 = jnp.roll(state, 1, axis=-1)
    return params[0] * (s_p1 - s_m2) * s_m1 - params[1] * state + params[2]


def lorenz96_integrate_reference(params, state, n_steps, dt):
    s = state
    for _ in range(n_steps):
        s = s + dt * lorenz96_reference(params, s)
    return s


# ---------------------------------------------------------------------------
# Demo / checks
# ---------------------------------------------------------------------------
if __name__ == "__main__":
    D = 128  # Lorenz96 dimension (lane-dense: multiple of 128)

    key = jax.random.PRNGKey(0)
    k_state, k_p, k_big = jax.random.split(key, 3)

    # Deterministic params (3, D): coupling ~1, damping ~1, forcing ~8 (+ noise).
    noise = 0.01 * jax.random.normal(k_p, (3, D), dtype=jnp.float32)
    params = jnp.stack(
        [jnp.ones((D,), jnp.float32),
         jnp.ones((D,), jnp.float32),
         jnp.full((D,), 8.0, jnp.float32)]
    ) + noise

    # --- Single-block forward check (grid=(1,)). ---
    B = 8
    state = jax.random.normal(k_state, (B, D), dtype=jnp.float32)
    out = jax.block_until_ready(lorenz96_forward(params, state))
    ref = lorenz96_reference(params, state)
    assert out.shape == state.shape and out.dtype == state.dtype
    assert jnp.allclose(out, ref, atol=1e-5, rtol=1e-5)

    # --- Multi-block forward check: exercises the batch-tiled grid (grid=(4,)). ---
    B2 = 64
    state2 = jax.random.normal(k_big, (B2, D), dtype=jnp.float32)
    out2 = jax.block_until_ready(lorenz96_forward(params, state2, block_rows=16))
    ref2 = lorenz96_reference(params, state2)
    assert jnp.allclose(out2, ref2, atol=1e-5, rtol=1e-5)

    # --- Fused multi-step Euler check: state resident on-chip for all steps. ---
    n_steps, dt = 10, 0.01
    out3 = jax.block_until_ready(
        lorenz96_integrate(params, state, n_steps=n_steps, dt=dt))
    ref3 = lorenz96_integrate_reference(params, state, n_steps, dt)
    assert jnp.allclose(out3, ref3, atol=1e-4, rtol=1e-4)

    print("KERNEL_OK")
</pallas_src>

<mosaic_0001>
module attributes {stable_mosaic.version = 11 : i64} {
  func.func @_lorenz96_kernel(%arg0: i32, %arg1: memref<3x128xf32, #tpu.memory_space<vmem>>, %arg2: memref<8x128xf32, #tpu.memory_space<vmem>>, %arg3: memref<8x128xf32, #tpu.memory_space<vmem>>) attributes {dimension_semantics = [#tpu.dimension_semantics<parallel>], iteration_bounds = array<i64: 1>, scalar_prefetch = 0 : i64, scratch_operands = 0 : i64, tpu.core_type = #tpu.core_type<tc>, window_params = [{pipeline_mode = #tpu.pipeline_mode<synchronous>, transform_indices = @transform_0, window_bounds = array<i64: 3, 128>}, {transform_indices = @transform_1, window_bounds = array<i64: 8, 128>}, {transform_indices = @transform_2, window_bounds = array<i64: 8, 128>}]} {
    %c0 = arith.constant 0 : index
    %c0_0 = arith.constant 0 : index
    %0 = vector.load %arg1[%c0, %c0_0] : memref<3x128xf32, #tpu.memory_space<vmem>>, vector<1x128xf32>
    %c1 = arith.constant 1 : index
    %c0_1 = arith.constant 0 : index
    %1 = vector.load %arg1[%c1, %c0_1] : memref<3x128xf32, #tpu.memory_space<vmem>>, vector<1x128xf32>
    %c2 = arith.constant 2 : index
    %c0_2 = arith.constant 0 : index
    %2 = vector.load %arg1[%c2, %c0_2] : memref<3x128xf32, #tpu.memory_space<vmem>>, vector<1x128xf32>
    %c0_3 = arith.constant 0 : index
    %c0_4 = arith.constant 0 : index
    %3 = vector.load %arg2[%c0_3, %c0_4] : memref<8x128xf32, #tpu.memory_space<vmem>>, vector<8x128xf32>
    %c127_i32 = arith.constant 127 : i32
    %4 = tpu.dynamic_rotate %3 by %c127_i32 dim 1 : vector<8x128xf32>, i32 -> vector<8x128xf32>
    %c2_i32 = arith.constant 2 : i32
    %5 = tpu.dynamic_rotate %3 by %c2_i32 dim 1 : vector<8x128xf32>, i32 -> vector<8x128xf32>
    %c1_i32 = arith.constant 1 : i32
    %6 = tpu.dynamic_rotate %3 by %c1_i32 dim 1 : vector<8x128xf32>, i32 -> vector<8x128xf32>
    %7 = arith.subf %4, %5 : vector<8x128xf32>
    %8 = vector.broadcast %0 : vector<1x128xf32> to vector<8x128xf32>
    %9 = arith.mulf %8, %7 : vector<8x128xf32>
    %10 = arith.mulf %9, %6 : vector<8x128xf32>
    %11 = vector.broadcast %1 : vector<1x128xf32> to vector<8x128xf32>
    %12 = arith.mulf %11, %3 : vector<8x128xf32>
    %13 = arith.subf %10, %12 : vector<8x128xf32>
    %14 = vector.broadcast %2 : vector<1x128xf32> to vector<8x128xf32>
    %15 = arith.addf %13, %14 : vector<8x128xf32>
    %c0_5 = arith.constant 0 : index
    %c0_6 = arith.constant 0 : index
    %16 = vector.load %arg3[%c0_5, %c0_6] : memref<8x128xf32, #tpu.memory_space<vmem>>, vector<8x128xf32>
    tpu.vector_store %arg3[%c0_5, %c0_6], %15 {strides = array<i32>} : memref<8x128xf32, #tpu.memory_space<vmem>>, vector<8x128xf32>,
    return
  }
  func.func @transform_0(%arg0: i32) -> (i32, i32) {
    %c0_i32 = arith.constant 0 : i32
    %c0_i32_0 = arith.constant 0 : i32
    %c0_i32_1 = arith.constant 0 : i32
    return %c0_i32, %c0_i32_0 : i32, i32
  }
  func.func @transform_1(%arg0: i32) -> (i32, i32) {
    %c0_i32 = arith.constant 0 : i32
    %c0_i32_0 = arith.constant 0 : i32
    return %arg0, %c0_i32 : i32, i32
  }
  func.func @transform_2(%arg0: i32) -> (i32, i32) {
    %c0_i32 = arith.constant 0 : i32
    %c0_i32_0 = arith.constant 0 : i32
    return %arg0, %c0_i32 : i32, i32
  }
}

</mosaic_0001>

<llo_original>
// kernel: tpu_custom_call.1
$region0: #{tpu_custom_call.1}
  #allocation0 [shape = 'u32[]', space=smem, size = 0x4, offset = 0x4, fixed_abs, tag = 'smem constant byte address 0x4 - core index']
  #allocation1 [shape = 'u32[144,128]{1,0:T(1,128)}', space=vmem, size = 0x12000, scoped, tag = 'internal scratch']
  %s0 = inlined_call_operand.hbm [shape: f32[3,128], index: 0, kind: input, shape index: {}]
  %s1 = inlined_call_operand.hbm [shape: f32[8,128], index: 1, kind: input, shape index: {}]
  %s2 = inlined_call_operand.hbm [shape: f32[8,128], index: 2, kind: output, shape index: {}]
  %s3 = sld [smem:[#allocation0]]
  $region26: #{tpu_custom_call.1} parent=0
    _
  %s5 = ssub.s32 1, %s3
  %s6 = scalar_select 0, %s5, %s3
  $region1: #{tpu_custom_call.1} parent=0
    #allocation2 [shape = 'u8[2048]{0}', space=vmem, size = 0x800, scoped, tag = 'input window, operand 0, single buffered']
    #allocation3 [shape = 's32[1]{0}', space=sflag, size = 0x4, scoped, tag = 'scoped memory for tpu_custom_call.1']
    #allocation4 [shape = 's32[1]{0}', space=sflag, size = 0x4, scoped, tag = 'scoped memory for tpu_custom_call.1']
    #allocation5 [shape = 'u8[4096]{0}', space=vmem, size = 0x1000, scoped, tag = 'input window, operand 1, single buffered']
    #allocation6 [shape = 's32[1]{0}', space=sflag, size = 0x4, scoped, tag = 'scoped memory for tpu_custom_call.1']
    #allocation7 [shape = 'u8[4096]{0}', space=vmem, size = 0x1000, scoped, tag = 'output window, operand 0, single buffered']
    %7 = vsyncpa [#allocation3], 0
    %8 = vsyncpa [#allocation6], 0
    %9 = vsyncpa [#allocation4], 0
    // Predicated region
    $region2: #{tpu_custom_call.1} parent=1 // pred_check
      _
    $region3: #{tpu_custom_call.1} parent=1 // pred_check_branch
      %11 = sbr.rel (0) target = $region5
    $region4: #{tpu_custom_call.1} parent=1 // pred_region
      %s13 = ssub.s32 64, 64
      %14 = vsyncadd [#allocation3], %s13
      %s16 = sshll.u32 [#allocation2], 4
      %s17 = int_to_ptr.vmem [resolvable:$true] %s16
      %19 = dma.hbm_to_vmem [thread:$0]  %s0, 64, %s17, [#allocation3]
    $region5: #{tpu_custom_call.1} parent=1 // pred_fallthru
      _
    // Predicated region
    $region6: #{tpu_custom_call.1} parent=1 // pred_check
      _
    $region7: #{tpu_custom_call.1} parent=1 // pred_check_branch
      %21 = sbr.rel (0) target = $region9
    $region8: #{tpu_custom_call.1} parent=1 // pred_region
      %s23 = ssub.s32 128, 128
      %24 = vsyncadd [#allocation6], %s23
      %s26 = sshll.u32 [#allocation5], 4
      %s27 = int_to_ptr.vmem [resolvable:$true] %s26
      %29 = dma.hbm_to_vmem [thread:$0]  %s1, 128, %s27, [#allocation6]
    $region9: #{tpu_custom_call.1} parent=1 // pred_fallthru
      _
    // Predicated region
    $region10: #{tpu_custom_call.1} parent=1 // pred_check
      _
    $region11: #{tpu_custom_call.1} parent=1 // pred_check_branch
      %31 = sbr.rel (0) target = $region13
    $region12: #{tpu_custom_call.1} parent=1 // pred_region
      %32 = dma.done [#allocation3], 64
    $region13: #{tpu_custom_call.1} parent=1 // pred_fallthru
      _
    // Predicated region
    $region14: #{tpu_custom_call.1} parent=1 // pred_check
      _
    $region15: #{tpu_custom_call.1} parent=1 // pred_check_branch
      %34 = sbr.rel (0) target = $region17
    $region16: #{tpu_custom_call.1} parent=1 // pred_region
      %35 = dma.done [#allocation6], 128
    $region17: #{tpu_custom_call.1} parent=1 // pred_fallthru
      _
    %v36 = vld [vmem:[#allocation2] sm:$0x1]
    %v37 = vld [vmem:[#allocation2 + $0x1] sm:$0x1]
    %v38 = vld [vmem:[#allocation2 + $0x2] sm:$0x1]
    %v39 = vld [vmem:[#allocation5] sm:$0xff]
    %40 = vrot.lane.b32.xlu0 %v39, 127
    %v41 = vpop.permute.xlu0 %40
    %42 = vrot.lane.b32.xlu0 %v39, 2
    %v43 = vpop.permute.xlu0 %42
    %44 = vrot.lane.b32.xlu0 %v39, 1
    %v45 = vpop.permute.xlu0 %44
    %v46 = vsub.f32 %v41, %v43
    %v47 = vlaneseq
    %v48 = vshrl.u32 %v47, 7
    %v49 = vsub.s32 0, %v48
    %v50 = vrot.slane %v36, %v49
    %v51 = vmul.f32 %v50, %v46
    %v52 = vmul.f32 %v51, %v45
    %v53 = vlaneseq
    %v54 = vshrl.u32 %v53, 7
    %v55 = vsub.s32 0, %v54
    %v56 = vrot.slane %v37, %v55
    %v57 = vmul.f32 %v56, %v39
    %v58 = vsub.f32 %v52, %v57
    %v59 = vlaneseq
    %v60 = vshrl.u32 %v59, 7
    %v61 = vsub.s32 0, %v60
    %v62 = vrot.slane %v38, %v61
    %v63 = vadd.f32 %v58, %v62
    %64 = vst [vmem:[#allocation7] sm:$0xff] %v63
    // Predicated region
    $region18: #{tpu_custom_call.1} parent=1 // pred_check
      _
    $region19: #{tpu_custom_call.1} parent=1 // pred_check_branch
      %66 = sbr.rel (0) target = $region21
    $region20: #{tpu_custom_call.1} parent=1 // pred_region
      %s68 = ssub.s32 128, 128
      %69 = vsyncadd [#allocation4], %s68
      %s71 = sshll.u32 [#allocation7], 4
      %s72 = int_to_ptr.vmem [resolvable:$true] %s71
      %74 = dma.vmem_to_hbm [thread:$0]  %s72, 128, %s2, [#allocation4]
    $region21: #{tpu_custom_call.1} parent=1 // pred_fallthru
      _
    // Predicated region
    $region22: #{tpu_custom_call.1} parent=1 // pred_check
      _
    $region23: #{tpu_custom_call.1} parent=1 // pred_check_branch
      %76 = sbr.rel (0) target = $region25
    $region24: #{tpu_custom_call.1} parent=1 // pred_region
      %77 = dma.done [#allocation4], 128
    $region25: #{tpu_custom_call.1} parent=1 // pred_fallthru
      _
    %78 = vsyncpa [#allocation3], 1
    %79 = vsyncpa [#allocation6], 1
    %80 = vsyncpa [#allocation4], 1

</llo_original>
